<compile_context>
chip_gen: v6e
topology: v6e:2x2x1
jax: 0.10.0
libtpu: 0.0.40
codegen_flags: <defaults>
</compile_context>

<pallas_src>
import math
import functools

import jax
import jax.numpy as jnp
from jax import lax
from jax.experimental import pallas as pl
from jax.experimental.pallas import tpu as pltpu


def _mdn_fused_kernel(x_ref, w_ref, b_ref, out_ref, *, G, GO):
    """Fused (pi|sigma|mu) GEMM + per-row epilogue.

    Lane layout of y = x @ W_fused + b_fused:
      [0, G)          -> pi logits  -> softmax over these lanes
      [G, G+GO)       -> sigma pre  -> ELU(s)+1+1e-15 == where(s>0, s+1, exp(s))+1e-15
      [G+GO, G+2*GO)  -> mu         -> identity
      [N, N_pad)      -> zero pad   -> identity (sliced off in the wrapper)
    """
    y = jnp.dot(x_ref[...], w_ref[...], preferred_element_type=jnp.float32) + b_ref[...]
    TB, N_pad = y.shape

    # ---- pi head: masked softmax restricted to the leading vreg-aligned chunk ----
    PI_CHUNK = min(N_pad, pl.cdiv(G, 128) * 128)      # static python int (mult. of 128)
    col_pi = lax.broadcasted_iota(jnp.int32, (1, PI_CHUNK), 1)
    is_pi = col_pi < G                                 # (1, PI_CHUNK), broadcasts
    y_pi = y[:, :PI_CHUNK]                             # static, lane-aligned slice
    logits = jnp.where(is_pi, y_pi, -jnp.inf)
    m = jnp.max(logits, axis=1, keepdims=True)
    e = jnp.exp(logits - m)                            # exp(-inf)=0 outside pi columns
    denom = jnp.sum(e, axis=1, keepdims=True)
    pi_vals = e * pl.reciprocal(denom, approx=False)

    # ---- sigma head: ELU(s) + 1 + 1e-15 == where(s>0, s+1, exp(s)) + 1e-15 ----
    col = lax.broadcasted_iota(jnp.int32, (1, N_pad), 1)
    is_sigma = (col >= G) & (col < G + GO)             # (1, N_pad), broadcasts
    # Clamp the exp input so unselected (pi/mu/pad) lanes never produce +inf.
    sigma_vals = jnp.where(y > 0, y + 1.0, jnp.exp(jnp.minimum(y, 0.0))) + 1e-15
    lin = jnp.where(is_sigma, sigma_vals, y)           # sigma merged; pi/mu/pad linear

    # ---- merge pi into the leading chunk; lane-aligned full-vreg stores ----
    head = jnp.where(is_pi, pi_vals, lin[:, :PI_CHUNK])
    if PI_CHUNK == N_pad:
        out_ref[...] = head.astype(out_ref.dtype)
    else:
        out_ref[:, :PI_CHUNK] = head.astype(out_ref.dtype)
        out_ref[:, PI_CHUNK:] = lin[:, PI_CHUNK:].astype(out_ref.dtype)


def prepare_fused_params(w_pi, b_pi, w_sigma, b_sigma, w_mu, b_mu):
    """Fuse + lane-pad the three heads ONCE (at init), not per forward call."""
    G = w_pi.shape[1]
    GO = w_sigma.shape[1]
    N = G + 2 * GO
    N_pad = pl.cdiv(N, 128) * 128
    w = jnp.concatenate([w_pi, w_sigma, w_mu], axis=1)
    b = jnp.concatenate([b_pi, b_sigma, b_mu], axis=1)
    if N_pad != N:
        w = jnp.pad(w, ((0, 0), (0, N_pad - N)))
        b = jnp.pad(b, ((0, 0), (0, N_pad - N)))
    return w, b, G, GO


@functools.partial(jax.jit, static_argnames=("G", "GO", "block_b", "out_dtype"))
def mdn_forward(x, w_fused, b_fused, *, G, GO, block_b=2048, out_dtype=jnp.float32):
    B, D = x.shape
    N_pad = w_fused.shape[1]

    # Batch tile: multiple of 8 (sublane). Big enough to amortize per-step overhead,
    # capped at block_b, and sized so large B gets >=4 grid steps (parallel axis ->
    # megacore sharding on multi-TC parts). VMEM budget per buffer pair:
    # 2*TB*(128 + N_pad)*4 bytes + D*N_pad*4 resident weight — TB=2048, N_pad=128
    # is ~4 MiB, far under the scoped limit on v5e/v6e/v7x.
    TB = max(8, min(block_b, pl.cdiv(B, 4 * 8) * 8))
    grid = (pl.cdiv(B, TB),)
    # No jnp.pad(x) / out[:B]: Pallas handles the partial trailing block (OOB output
    # rows are dropped; epilogue is strictly per-row so garbage tail rows are harmless).

    kernel = functools.partial(_mdn_fused_kernel, G=G, GO=GO)
    out = pl.pallas_call(
        kernel,
        out_shape=jax.ShapeDtypeStruct((B, N_pad), out_dtype),
        grid=grid,
        in_specs=[
            pl.BlockSpec((TB, D), lambda i: (i, 0)),       # x: double-buffered over batch
            pl.BlockSpec((D, N_pad), lambda i: (0, 0)),    # fused W: VMEM-resident
            pl.BlockSpec((1, N_pad), lambda i: (0, 0)),    # fused b: VMEM-resident
        ],
        out_specs=pl.BlockSpec((TB, N_pad), lambda i: (i, 0)),
        compiler_params=pltpu.CompilerParams(
            dimension_semantics=("parallel",),
        ),
    )(x, w_fused, b_fused)

    # Column slices are cheap relative to the kernel and are fused by XLA into
    # consumers; the heads are contiguous lane ranges of the fused output.
    pi = out[:, :G]
    sigma = out[:, G:G + GO]
    mu = out[:, G + GO:G + 2 * GO]
    return pi, sigma, mu


def init_linear(key, in_features, out_features):
    """PyTorch nn.Linear default init: U(-1/sqrt(in), 1/sqrt(in))."""
    kw, kb = jax.random.split(key)
    bound = 1.0 / math.sqrt(in_features)
    # stored transposed: (in_features, out_features)
    w = jax.random.uniform(kw, (in_features, out_features), jnp.float32, -bound, bound)
    b = jax.random.uniform(kb, (1, out_features), jnp.float32, -bound, bound)
    return w, b


def reference(x, w_pi, b_pi, w_sigma, b_sigma, w_mu, b_mu):
    pi = jax.nn.softmax(x @ w_pi + b_pi, axis=1)
    s = x @ w_sigma + b_sigma
    sigma = jnp.where(s > 0, s, jnp.exp(s) - 1.0) + 1.0 + 1e-15   # ELU + 1 + 1e-15
    mu = x @ w_mu + b_mu
    return pi, sigma, mu


if __name__ == "__main__":
    # Small shapes consistent with the module: B x D_in -> (B,G), (B,G*O), (B,G*O)
    B, in_features, out_features, num_gaussians = 8, 32, 4, 8

    key = jax.random.PRNGKey(0)
    kx, kpi, ksig, kmu = jax.random.split(key, 4)

    x = jax.random.normal(kx, (B, in_features), jnp.float32)
    w_pi, b_pi = init_linear(kpi, in_features, num_gaussians)
    w_sigma, b_sigma = init_linear(ksig, in_features, out_features * num_gaussians)
    w_mu, b_mu = init_linear(kmu, in_features, out_features * num_gaussians)

    # Fuse/pad the parameters once (module "init" time).
    w_fused, b_fused, G, GO = prepare_fused_params(
        w_pi, b_pi, w_sigma, b_sigma, w_mu, b_mu)

    pi, sigma, mu = mdn_forward(x, w_fused, b_fused, G=G, GO=GO)
    jax.block_until_ready((pi, sigma, mu))

    pi_r, sigma_r, mu_r = reference(x, w_pi, b_pi, w_sigma, b_sigma, w_mu, b_mu)
    assert pi.shape == (B, num_gaussians)
    assert sigma.shape == (B, out_features * num_gaussians)
    assert mu.shape == (B, out_features * num_gaussians)
    assert jnp.allclose(pi, pi_r, atol=1e-5, rtol=1e-5)
    assert jnp.allclose(sigma, sigma_r, atol=1e-5, rtol=1e-5)
    assert jnp.allclose(mu, mu_r, atol=1e-5, rtol=1e-5)

    print("KERNEL_OK")
</pallas_src>

<mosaic_0001>
module attributes {stable_mosaic.version = 11 : i64} {
  func.func @_mdn_fused_kernel(%arg0: i32, %arg1: memref<8x32xf32, #tpu.memory_space<vmem>>, %arg2: memref<32x128xf32, #tpu.memory_space<vmem>>, %arg3: memref<1x128xf32, #tpu.memory_space<vmem>>, %arg4: memref<8x128xf32, #tpu.memory_space<vmem>>) attributes {dimension_semantics = [#tpu.dimension_semantics<parallel>], iteration_bounds = array<i64: 1>, scalar_prefetch = 0 : i64, scratch_operands = 0 : i64, tpu.core_type = #tpu.core_type<tc>, window_params = [{transform_indices = @transform_0, window_bounds = array<i64: 8, 32>}, {pipeline_mode = #tpu.pipeline_mode<synchronous>, transform_indices = @transform_1, window_bounds = array<i64: 32, 128>}, {pipeline_mode = #tpu.pipeline_mode<synchronous>, transform_indices = @transform_2, window_bounds = array<i64: 1, 128>}, {transform_indices = @transform_3, window_bounds = array<i64: 8, 128>}]} {
    %c0 = arith.constant 0 : index
    %c0_0 = arith.constant 0 : index
    %0 = vector.load %arg1[%c0, %c0_0] : memref<8x32xf32, #tpu.memory_space<vmem>>, vector<8x32xf32>
    %c0_1 = arith.constant 0 : index
    %c0_2 = arith.constant 0 : index
    %1 = vector.load %arg2[%c0_1, %c0_2] : memref<32x128xf32, #tpu.memory_space<vmem>>, vector<32x128xf32>
    %cst = arith.constant dense<0.000000e+00> : vector<8x128xf32>
    %2 = tpu.matmul %0, %1, %cst {dimension_numbers = #tpu.dot_dimension_numbers<[1], [0], [0], [1], [0, 0, 1, 1], [], []>} : vector<8x32xf32>, vector<32x128xf32>, vector<8x128xf32> -> vector<8x128xf32>
    %c0_3 = arith.constant 0 : index
    %c0_4 = arith.constant 0 : index
    %3 = vector.load %arg3[%c0_3, %c0_4] : memref<1x128xf32, #tpu.memory_space<vmem>>, vector<1x128xf32>
    %4 = vector.broadcast %3 : vector<1x128xf32> to vector<8x128xf32>
    %5 = arith.addf %2, %4 : vector<8x128xf32>
    %6 = tpu.iota {dimensions = array<i32: 1>} : vector<1x128xi32>
    %c8_i32 = arith.constant 8 : i32
    %7 = vector.broadcast %c8_i32 : i32 to vector<1x128xi32>
    %8 = arith.cmpi slt, %6, %7 : vector<1x128xi32>
    %cst_5 = arith.constant 0xFF800000 : f32
    %9 = vector.shape_cast %8 : vector<1x128xi1> to vector<1x128xi1>
    %10 = vector.broadcast %9 : vector<1x128xi1> to vector<8x128xi1>
    %11 = vector.broadcast %cst_5 : f32 to vector<8x128xf32>
    %12 = arith.select %10, %5, %11 : vector<8x128xi1>, vector<8x128xf32>
    %cst_6 = arith.constant dense<0xFF800000> : vector<8xf32>
    %13 = vector.multi_reduction <maximumf>, %12, %cst_6 [1] : vector<8x128xf32> to vector<8xf32>
    %14 = vector.shape_cast %13 : vector<8xf32> to vector<8x1xf32>
    %15 = vector.broadcast %14 : vector<8x1xf32> to vector<8x128xf32>
    %16 = arith.subf %12, %15 : vector<8x128xf32>
    %17 = math.exp %16 : vector<8x128xf32>
    %cst_7 = arith.constant dense<0.000000e+00> : vector<8xf32>
    %18 = vector.multi_reduction <add>, %17, %cst_7 [1] : vector<8x128xf32> to vector<8xf32>
    %19 = vector.shape_cast %18 : vector<8xf32> to vector<8x1xf32>
    %20 = tpu.reciprocal %19 : vector<8x1xf32> -> vector<8x1xf32>
    %21 = vector.broadcast %20 : vector<8x1xf32> to vector<8x128xf32>
    %22 = arith.mulf %17, %21 : vector<8x128xf32>
    %23 = tpu.iota {dimensions = array<i32: 1>} : vector<1x128xi32>
    %c8_i32_8 = arith.constant 8 : i32
    %24 = vector.broadcast %c8_i32_8 : i32 to vector<1x128xi32>
    %25 = arith.cmpi sge, %23, %24 : vector<1x128xi32>
    %c40_i32 = arith.constant 40 : i32
    %26 = vector.broadcast %c40_i32 : i32 to vector<1x128xi32>
    %27 = arith.cmpi slt, %23, %26 : vector<1x128xi32>
    %28 = arith.andi %25, %27 : vector<1x128xi1>
    %cst_9 = arith.constant 0.000000e+00 : f32
    %29 = vector.broadcast %cst_9 : f32 to vector<8x128xf32>
    %30 = arith.cmpf ogt, %5, %29 : vector<8x128xf32>
    %cst_10 = arith.constant 1.000000e+00 : f32
    %31 = vector.broadcast %cst_10 : f32 to vector<8x128xf32>
    %32 = arith.addf %5, %31 : vector<8x128xf32>
    %cst_11 = arith.constant 0.000000e+00 : f32
    %33 = vector.broadcast %cst_11 : f32 to vector<8x128xf32>
    %34 = arith.minimumf %5, %33 : vector<8x128xf32>
    %35 = math.exp %34 : vector<8x128xf32>
    %36 = arith.select %30, %32, %35 : vector<8x128xi1>, vector<8x128xf32>
    %cst_12 = arith.constant 1.000000e-15 : f32
    %37 = vector.broadcast %cst_12 : f32 to vector<8x128xf32>
    %38 = arith.addf %36, %37 : vector<8x128xf32>
    %39 = vector.shape_cast %28 : vector<1x128xi1> to vector<1x128xi1>
    %40 = vector.broadcast %39 : vector<1x128xi1> to vector<8x128xi1>
    %41 = arith.select %40, %38, %5 : vector<8x128xi1>, vector<8x128xf32>
    %42 = vector.shape_cast %8 : vector<1x128xi1> to vector<1x128xi1>
    %43 = vector.broadcast %42 : vector<1x128xi1> to vector<8x128xi1>
    %44 = arith.select %43, %22, %41 : vector<8x128xi1>, vector<8x128xf32>
    %c0_13 = arith.constant 0 : index
    %c0_14 = arith.constant 0 : index
    %45 = vector.load %arg4[%c0_13, %c0_14] : memref<8x128xf32, #tpu.memory_space<vmem>>, vector<8x128xf32>
    tpu.vector_store %arg4[%c0_13, %c0_14], %44 {strides = array<i32>} : memref<8x128xf32, #tpu.memory_space<vmem>>, vector<8x128xf32>,
    return
  }
  func.func @transform_0(%arg0: i32) -> (i32, i32) {
    %c0_i32 = arith.constant 0 : i32
    %c0_i32_0 = arith.constant 0 : i32
    return %arg0, %c0_i32 : i32, i32
  }
  func.func @transform_1(%arg0: i32) -> (i32, i32) {
    %c0_i32 = arith.constant 0 : i32
    %c0_i32_0 = arith.constant 0 : i32
    %c0_i32_1 = arith.constant 0 : i32
    return %c0_i32, %c0_i32_0 : i32, i32
  }
  func.func @transform_2(%arg0: i32) -> (i32, i32) {
    %c0_i32 = arith.constant 0 : i32
    %c0_i32_0 = arith.constant 0 : i32
    %c0_i32_1 = arith.constant 0 : i32
    return %c0_i32, %c0_i32_0 : i32, i32
  }
  func.func @transform_3(%arg0: i32) -> (i32, i32) {
    %c0_i32 = arith.constant 0 : i32
    %c0_i32_0 = arith.constant 0 : i32
    return %arg0, %c0_i32 : i32, i32
  }
}

</mosaic_0001>

<llo_original>
// kernel: mdn_forward.1
$region0: #{mdn_forward.1}
  #allocation0 [shape = 'u32[]', space=smem, size = 0x4, offset = 0x4, fixed_abs, tag = 'smem constant byte address 0x4 - core index']
  #allocation1 [shape = 'u32[144,128]{1,0:T(1,128)}', space=vmem, size = 0x12000, scoped, tag = 'internal scratch']
  %s0 = inlined_call_operand.hbm [shape: f32[8,32], index: 0, kind: input, shape index: {}]
  %s1 = inlined_call_operand.hbm [shape: f32[32,128], index: 1, kind: input, shape index: {}]
  %s2 = inlined_call_operand.vmem [shape: f32[1,128], index: 2, kind: input, shape index: {}]
  %s3 = inlined_call_operand.vmem [shape: f32[8,128], index: 3, kind: output, shape index: {}]
  %s4 = sld [smem:[#allocation0]]
  $region30: #{mdn_forward.1} parent=0
    _
  %s6 = ssub.s32 1, %s4
  %s7 = scalar_select 0, %s6, %s4
  $region1: #{mdn_forward.1} parent=0
    #allocation2 [shape = 'u8[4096]{0}', space=vmem, size = 0x1000, scoped, tag = 'input window, operand 0, single buffered']
    #allocation3 [shape = 's32[1]{0}', space=sflag, size = 0x4, scoped, tag = 'scoped memory for mdn_forward.1']
    #allocation4 [shape = 'u8[16384]{0}', space=vmem, size = 0x4000, scoped, tag = 'input window, operand 1, single buffered']
    #allocation5 [shape = 's32[1]{0}', space=sflag, size = 0x4, scoped, tag = 'scoped memory for mdn_forward.1']
    %8 = vsyncpa [#allocation3], 0
    %9 = vsyncpa [#allocation5], 0
    // Predicated region
    $region2: #{mdn_forward.1} parent=1 // pred_check
      _
    $region3: #{mdn_forward.1} parent=1 // pred_check_branch
      %11 = sbr.rel (0) target = $region5
    $region4: #{mdn_forward.1} parent=1 // pred_region
      %s13 = ssub.s32 128, 128
      %14 = vsyncadd [#allocation3], %s13
      %s16 = sshll.u32 [#allocation2], 4
      %s17 = int_to_ptr.vmem [resolvable:$true] %s16
      %19 = dma.hbm_to_vmem [thread:$0]  %s0, 128, %s17, [#allocation3]
    $region5: #{mdn_forward.1} parent=1 // pred_fallthru
      _
    // Predicated region
    $region6: #{mdn_forward.1} parent=1 // pred_check
      _
    $region7: #{mdn_forward.1} parent=1 // pred_check_branch
      %21 = sbr.rel (0) target = $region9
    $region8: #{mdn_forward.1} parent=1 // pred_region
      %s23 = ssub.s32 512, 512
      %24 = vsyncadd [#allocation5], %s23
      %s25 = sshll.u32 [#allocation4], 4
      %s26 = int_to_ptr.vmem [resolvable:$true] %s25
      %31 = dma.hbm_to_vmem [thread:$0]  %s1, 512, %s26, [#allocation5], 128, 128, 8
    $region9: #{mdn_forward.1} parent=1 // pred_fallthru
      _
    // Predicated region
    $region10: #{mdn_forward.1} parent=1 // pred_check
      _
    $region11: #{mdn_forward.1} parent=1 // pred_check_branch
      %33 = sbr.rel (0) target = $region13
    $region12: #{mdn_forward.1} parent=1 // pred_region
      _
    $region13: #{mdn_forward.1} parent=1 // pred_fallthru
      _
    // Predicated region
    $region14: #{mdn_forward.1} parent=1 // pred_check
      _
    $region15: #{mdn_forward.1} parent=1 // pred_check_branch
      %35 = sbr.rel (0) target = $region17
    $region16: #{mdn_forward.1} parent=1 // pred_region
      %36 = dma.done [#allocation3], 128
    $region17: #{mdn_forward.1} parent=1 // pred_fallthru
      _
    // Predicated region
    $region18: #{mdn_forward.1} parent=1 // pred_check
      _
    $region19: #{mdn_forward.1} parent=1 // pred_check_branch
      %38 = sbr.rel (0) target = $region21
    $region20: #{mdn_forward.1} parent=1 // pred_region
      %39 = dma.done [#allocation5], 512
    $region21: #{mdn_forward.1} parent=1 // pred_fallthru
      _
    %v40 = vld [vmem:[#allocation2] sm:$0xff]
    %v41 = vld [vmem:[#allocation4] sm:$0xff]
    %v42 = vld [vmem:[#allocation4 + $0x8] sm:$0xff]
    %v43 = vld [vmem:[#allocation4 + $0x10] sm:$0xff]
    %v44 = vld [vmem:[#allocation4 + $0x18] sm:$0xff]
    %v45 = vld [vmem:[%s2] sm:$0x1]
    %v47 = vlaneseq
    %v48 = vshrl.u32 %v47, 7
    %v49 = vsub.s32 0, %v48
    %v50 = vrot.slane %v45, %v49
    %vm52 = vcmask 261120
    %v54 = vsel %vm52, %v40, 0
    %56 = vmatprep.subr.mxu0 0.0
    %57 = vmatpush1.msra.mxu0 0.0
    %58 = vmatprep.subr.mxu0 0.0
    %59 = vmatpush1.msra.mxu0 0.0
    %60 = vmatprep.subr.mxu0 0.0
    %61 = vmatpush1.msra.mxu0 0.0
    %62 = vmatprep.subr.mxu0 0.0
    %63 = vmatpush1.msra.mxu0 0.0
    %64 = vmatprep.subr.mxu0 0.0
    %65 = vmatpush1.msra.mxu0 0.0
    %66 = vmatprep.subr.mxu0 0.0
    %67 = vmatpush1.msra.mxu0 0.0
    %68 = vmatprep.subr.mxu0 0.0
    %69 = vmatpush1.msra.mxu0 0.0
    %70 = vmatprep.subr.mxu0 0.0
    %71 = vmatpush1.msra.mxu0 0.0
    %72 = vmatprep.subr.mxu0 0.0
    %73 = vmatpush1.msra.mxu0 0.0
    %74 = vmatprep.subr.mxu0 0.0
    %75 = vmatpush1.msra.mxu0 0.0
    %76 = vmatprep.subr.mxu0 0.0
    %77 = vmatpush1.msra.mxu0 0.0
    %78 = vmatprep.subr.mxu0 0.0
    %79 = vmatpush1.msra.mxu0 0.0
    %80 = vmatprep.subr.mxu0 0.0
    %81 = vmatpush1.msra.mxu0 %v44
    %82 = vmatprep.subr.mxu0 0.0
    %83 = vmatpush1.msra.mxu0 %v43
    %84 = vmatprep.subr.mxu0 0.0
    %85 = vmatpush1.msra.mxu0 %v42
    %86 = vmatprep.subr.mxu0 0.0
    %87 = vmatpush1.msra.mxu0 %v41
    %88 = vmatprep.subr.mxu0 0.0
    %89 = vmatpush2.msra.mxu0 0.0
    %90 = vmatprep.subr.mxu0 0.0
    %91 = vmatpush2.msra.mxu0 0.0
    %92 = vmatprep.subr.mxu0 0.0
    %93 = vmatpush2.msra.mxu0 0.0
    %94 = vmatprep.subr.mxu0 0.0
    %95 = vmatpush2.msra.mxu0 0.0
    %96 = vmatprep.subr.mxu0 0.0
    %97 = vmatpush2.msra.mxu0 0.0
    %98 = vmatprep.subr.mxu0 0.0
    %99 = vmatpush2.msra.mxu0 0.0
    %100 = vmatprep.subr.mxu0 0.0
    %101 = vmatpush2.msra.mxu0 0.0
    %102 = vmatprep.subr.mxu0 0.0
    %103 = vmatpush2.msra.mxu0 0.0
    %104 = vmatprep.subr.mxu0 0.0
    %105 = vmatpush2.msra.mxu0 0.0
    %106 = vmatprep.subr.mxu0 0.0
    %107 = vmatpush2.msra.mxu0 0.0
    %108 = vmatprep.subr.mxu0 0.0
    %109 = vmatpush2.msra.mxu0 0.0
    %110 = vmatprep.subr.mxu0 0.0
    %111 = vmatpush2.msra.mxu0 0.0
    %112 = vmatprep.subr.mxu0 0.0
    %113 = vmatpush2.msra.mxu0 0.0
    %114 = vmatprep.subr.mxu0 0.0
    %115 = vmatpush2.msra.mxu0 0.0
    %116 = vmatprep.subr.mxu0 0.0
    %117 = vmatpush2.msra.mxu0 0.0
    %118 = vmatprep.subr.mxu0 0.0
    %119 = vmatpush2.msra.mxu0 0.0
    %120 = vmatprep.mubr.f32.mxu0 0.0
    %121 = vmatmul.mubr.f32.gmra.mxu0 %v54
    %v122 = vpop.f32.mrf.mxu0
    %v123 = vadd.f32 %v50, %v122
    %v124 = vpop.f32.mrf.mxu0
    %125 = vdwg.mxu0
    %v126 = vlaneseq
    %v127 = vand.u32 %v126, 127
    %vm128 = vcmp.lt.s32.totalorder %v127, 8
    %v129 = vsel %vm128, 1, 0
    %vm130 = vcmp.eq.s32.totalorder %v129, 1
    %v131 = vsel %vm130, %v123, -inf
    %132 = vmax.xlane.f32.xlu0 %v131
    %v133 = vpop.xlane.xlu0 %132
    %v134 = vsub.f32 %v131, %v133
    %v135 = vmul.f32 %v134, 1.442695
    %v136 = vpow.pop %v135
    %137 = vadd.xlane.f32.xlu0 %v136
    %v138 = vpop.xlane.xlu0 %137
    %v139 = vrcp.pop %v138
    %v140 = vmul.f32 %v136, %v139
    %vm141 = vcmp.ge.s32.totalorder %v127, 8
    %vm142 = vcmp.lt.s32.totalorder %v127, 40
    %vm143 = vmand %vm141, %vm142
    %vm144 = vcmp.gt.f32.partialorder %v123, 0.0
    %v145 = vadd.f32 %v123, 1.0
    %v146 = vmin.f32 %v123, 0.0
    %v147 = vmul.f32 %v146, 1.442695
    %v148 = vpow.pop %v147
    %v149 = vsel %vm144, %v145, %v148
    %v150 = vadd.f32 %v149, 1e-15
    %v151 = vsel %vm143, 1, 0
    %vm152 = vcmp.eq.s32.totalorder %v151, 1
    %v153 = vsel %vm152, %v150, %v123
    %v154 = vsel %vm130, %v140, %v153
    %155 = vst [vmem:[%s3] sm:$0xff] %v154
    // Predicated region
    $region22: #{mdn_forward.1} parent=1 // pred_check
      _
    $region23: #{mdn_forward.1} parent=1 // pred_check_branch
      %157 = sbr.rel (0) target = $region25
    $region24: #{mdn_forward.1} parent=1 // pred_region
      _
    $region25: #{mdn_forward.1} parent=1 // pred_fallthru
      _
    // Predicated region
    $region26: #{mdn_forward.1} parent=1 // pred_check
      _
    $region27: #{mdn_forward.1} parent=1 // pred_check_branch
      %159 = sbr.rel (0) target = $region29
    $region28: #{mdn_forward.1} parent=1 // pred_region
      _
    $region29: #{mdn_forward.1} parent=1 // pred_fallthru
      _
    %160 = vsyncpa [#allocation3], 1
    %161 = vsyncpa [#allocation5], 1

</llo_original>
